<compile_context>
chip_gen: v7x
topology: tpu7x:2x2x1
jax: 0.10.0
libtpu: 0.0.40
codegen_flags: <defaults>
</compile_context>

<pallas_src>
import functools

import jax
import jax.numpy as jnp
from jax.experimental import pallas as pl
from jax.experimental.pallas import tpu as pltpu


def semantic_attention_kernel(z_ref, w1bd_ref, b1_ref, w2bd_ref, out_ref):
    D = out_ref.shape[1]
    MD = z_ref.shape[1]
    M = MD // D

    z = z_ref[...]                                              # (tB, M*D), mxu dtype

    # -- projection 1: tanh(z @ blockdiag(W1^T) + tile(b1)) -> (tB, M*H), f32, lane-dense
    h = jnp.dot(z, w1bd_ref[...], preferred_element_type=jnp.float32)
    t = jnp.tanh(h + b1_ref[...])                               # EUP tanh, f32

    # -- projection 2 (H -> 1 per view): t @ blockdiag(w2) -> (tB, M) attention scores
    s = jnp.dot(t.astype(w2bd_ref.dtype), w2bd_ref[...],
                preferred_element_type=jnp.float32)             # (tB, M)

    # -- softmax over the semantic-view axis M (torch dim=1), all f32 -------------------
    mx = jnp.max(s, axis=-1, keepdims=True)                     # (tB, 1)
    e = jnp.exp(s - mx)                                         # (tB, M)
    den = jnp.sum(e, axis=-1, keepdims=True)                    # (tB, 1)
    inv = pl.reciprocal(den, approx=True)                       # EUP seed
    inv = inv * (2.0 - den * inv)                               # one Newton step -> ~exact f32
    beta = e * inv                                              # (tB, M)

    # -- out[b, d] = sum_m beta[b, m] * z[b, m*D + d]  (f32 accumulation, static unroll) --
    zf = z.astype(jnp.float32)
    acc = beta[:, 0:1] * zf[:, 0:D]
    for m in range(1, M):
        acc = acc + beta[:, m:m + 1] * zf[:, m * D:(m + 1) * D]
    out_ref[...] = acc.astype(out_ref.dtype)


def _pick_block_b(B, M, D, H, z_itemsize, vmem_budget_bytes=20 * 1024 * 1024):
    """VMEM-budgeted block size along B (reviewer formula incl. live f32 temps)."""
    per_row = (2 * (M * D * z_itemsize + D * 4)   # double-buffered z tile + f32 out tile
               + 2 * M * H * 4                    # h / tanh f32 temps
               + M * H * z_itemsize               # score-matmul operand cast
               + M * D * 4)                       # f32 upcast of the z tile
    weights = (M * D) * (M * H) * z_itemsize + M * H * 4 + (M * H) * M * z_itemsize
    max_bb = max(8, (vmem_budget_bytes - weights) // per_row)
    max_bb = (max_bb // 8) * 8

    valid = [d for d in range(1, B + 1) if B % d == 0 and (d % 8 == 0 or d == B)]
    fitting = [d for d in valid if d <= max_bb]
    block_b = max(fitting) if fitting else min(valid)
    # Prefer >= 2 grid steps when possible so v7x's two TensorCores both get work.
    if block_b == B and (B // 2) in valid and (B // 2) <= max_bb:
        block_b = B // 2
    return block_b


@functools.partial(jax.jit, static_argnames=("block_b", "mxu_dtype"))
def semantic_attention(z, w1, b1, w2, *, block_b=None, mxu_dtype=jnp.bfloat16):
    """z: (B, M, D). w1: (H, D), b1: (H,), w2: (1, H) in nn.Linear weight layout."""
    B, M, D = z.shape
    H = w1.shape[0]
    mxu_dtype = jnp.dtype(mxu_dtype)

    if block_b is None:
        block_b = _pick_block_b(B, M, D, H, mxu_dtype.itemsize)
    assert B % block_b == 0, "pad B to a multiple of block_b in the caller"
    assert block_b == B or block_b % 8 == 0, "block_b must be 8-aligned (sublane tiling)"

    # --- one-time layout / dtype plumbing (wrapper-side XLA ops, not per-grid-step) ----
    z2 = z.reshape(B, M * D).astype(mxu_dtype)                        # lane-dense z slab
    eye = jnp.eye(M, dtype=jnp.float32)
    w1bd = jnp.kron(eye, jnp.transpose(w1)).astype(mxu_dtype)         # (M*D, M*H) blockdiag W1^T
    b1t = jnp.tile(b1, M).reshape(1, M * H).astype(jnp.float32)       # (1, M*H)
    w2bd = jnp.kron(eye, jnp.reshape(w2, (H, 1))).astype(mxu_dtype)   # (M*H, M) blockdiag w2

    grid = (B // block_b,)
    return pl.pallas_call(
        semantic_attention_kernel,
        out_shape=jax.ShapeDtypeStruct((B, D), jnp.float32),
        grid_spec=pltpu.PrefetchScalarGridSpec(
            num_scalar_prefetch=0,
            grid=grid,
            in_specs=[
                pl.BlockSpec((block_b, M * D), lambda i: (i, 0)),   # z tile (lane-dense)
                pl.BlockSpec((M * D, M * H), lambda i: (0, 0)),     # blockdiag(W1^T), resident
                pl.BlockSpec((1, M * H), lambda i: (0, 0)),         # tiled bias
                pl.BlockSpec((M * H, M), lambda i: (0, 0)),         # blockdiag(w2), resident
            ],
            out_specs=pl.BlockSpec((block_b, D), lambda i: (i, 0)),
        ),
        compiler_params=pltpu.CompilerParams(
            dimension_semantics=("parallel",),    # B-tiles independent -> pipelining + megacore
            vmem_limit_bytes=48 * 1024 * 1024,    # > v5e 16 MiB scoped default, < v7x 64 MiB phys
        ),
    )(z2, w1bd, b1t, w2bd)


def reference(z, w1, b1, w2):
    h = jnp.tanh(jnp.einsum('bmd,hd->bmh', z, w1) + b1)      # (B, M, H)
    w = jnp.einsum('bmh,oh->bmo', h, w2)[..., 0]             # (B, M)
    beta = jax.nn.softmax(w, axis=1)
    return jnp.sum(beta[..., None] * z, axis=1)              # (B, D)


if __name__ == "__main__":
    key = jax.random.PRNGKey(0)
    B, M, D, H = 16, 4, 32, 128     # nodes, semantic views, in_size, hidden_size (module default)
    k1, k2, k3, k4, k5 = jax.random.split(key, 5)
    z = jax.random.normal(k1, (B, M, D), dtype=jnp.float32)
    # deterministic parameters, nn.Linear weight layout (out_features, in_features)
    w1 = jax.random.normal(k2, (H, D), dtype=jnp.float32) * 0.1
    b1 = jax.random.normal(k3, (H,), dtype=jnp.float32) * 0.1
    w2 = jax.random.normal(k4, (1, H), dtype=jnp.float32) * 0.1

    ref = reference(z, w1, b1, w2)

    # strict f32 path: faithful to the torch module semantics
    out_f32 = jax.block_until_ready(semantic_attention(z, w1, b1, w2, mxu_dtype=jnp.float32))
    assert out_f32.shape == (B, D)
    assert jnp.allclose(out_f32, ref, atol=1e-3, rtol=1e-3), "f32 mismatch vs reference"

    # default perf path: bf16 z DMA + bf16 MXU operands, f32 softmax / accumulation
    out_bf16 = jax.block_until_ready(semantic_attention(z, w1, b1, w2))
    assert out_bf16.shape == (B, D)
    assert jnp.allclose(out_bf16, ref, atol=3e-2, rtol=3e-2), "bf16 mismatch vs reference"

    # larger B to exercise the VMEM-budgeted tiling and a >=2-step parallel grid
    B2 = 256
    z_big = jax.random.normal(k5, (B2, M, D), dtype=jnp.float32)
    out_big = jax.block_until_ready(semantic_attention(z_big, w1, b1, w2))
    ref_big = reference(z_big, w1, b1, w2)
    assert out_big.shape == (B2, D)
    assert jnp.allclose(out_big, ref_big, atol=3e-2, rtol=3e-2), "bf16 mismatch (B=256)"

    print("KERNEL_OK")
</pallas_src>

<mosaic_0001>
module attributes {stable_mosaic.version = 11 : i64} {
  func.func @semantic_attention_kernel(%arg0: i32, %arg1: memref<8x128xf32, #tpu.memory_space<vmem>>, %arg2: memref<128x512xf32, #tpu.memory_space<vmem>>, %arg3: memref<1x512xf32, #tpu.memory_space<vmem>>, %arg4: memref<512x4xf32, #tpu.memory_space<vmem>>, %arg5: memref<8x32xf32, #tpu.memory_space<vmem>>) attributes {dimension_semantics = [#tpu.dimension_semantics<parallel>], iteration_bounds = array<i64: 2>, scalar_prefetch = 0 : i64, scratch_operands = 0 : i64, tpu.core_type = #tpu.core_type<tc>, window_params = [{transform_indices = @transform_0, window_bounds = array<i64: 8, 128>}, {pipeline_mode = #tpu.pipeline_mode<synchronous>, transform_indices = @transform_1, window_bounds = array<i64: 128, 512>}, {pipeline_mode = #tpu.pipeline_mode<synchronous>, transform_indices = @transform_2, window_bounds = array<i64: 1, 512>}, {pipeline_mode = #tpu.pipeline_mode<synchronous>, transform_indices = @transform_3, window_bounds = array<i64: 512, 4>}, {transform_indices = @transform_4, window_bounds = array<i64: 8, 32>}]} {
    %c0 = arith.constant 0 : index
    %c0_0 = arith.constant 0 : index
    %0 = vector.load %arg1[%c0, %c0_0] : memref<8x128xf32, #tpu.memory_space<vmem>>, vector<8x128xf32>
    %c0_1 = arith.constant 0 : index
    %c0_2 = arith.constant 0 : index
    %1 = vector.load %arg2[%c0_1, %c0_2] : memref<128x512xf32, #tpu.memory_space<vmem>>, vector<128x512xf32>
    %cst = arith.constant dense<0.000000e+00> : vector<8x512xf32>
    %2 = tpu.matmul %0, %1, %cst {dimension_numbers = #tpu.dot_dimension_numbers<[1], [0], [0], [1], [0, 0, 1, 1], [], []>} : vector<8x128xf32>, vector<128x512xf32>, vector<8x512xf32> -> vector<8x512xf32>
    %c0_3 = arith.constant 0 : index
    %c0_4 = arith.constant 0 : index
    %3 = vector.load %arg3[%c0_3, %c0_4] : memref<1x512xf32, #tpu.memory_space<vmem>>, vector<1x512xf32>
    %4 = vector.broadcast %3 : vector<1x512xf32> to vector<8x512xf32>
    %5 = arith.addf %2, %4 : vector<8x512xf32>
    %6 = math.tanh %5 : vector<8x512xf32>
    %c0_5 = arith.constant 0 : index
    %c0_6 = arith.constant 0 : index
    %7 = vector.load %arg4[%c0_5, %c0_6] : memref<512x4xf32, #tpu.memory_space<vmem>>, vector<512x4xf32>
    %cst_7 = arith.constant dense<0.000000e+00> : vector<8x4xf32>
    %8 = tpu.matmul %6, %7, %cst_7 {dimension_numbers = #tpu.dot_dimension_numbers<[1], [0], [0], [1], [0, 0, 1, 1], [], []>} : vector<8x512xf32>, vector<512x4xf32>, vector<8x4xf32> -> vector<8x4xf32>
    %cst_8 = arith.constant dense<0xFF800000> : vector<8xf32>
    %9 = vector.multi_reduction <maximumf>, %8, %cst_8 [1] : vector<8x4xf32> to vector<8xf32>
    %10 = vector.shape_cast %9 : vector<8xf32> to vector<8x1xf32>
    %11 = vector.broadcast %10 : vector<8x1xf32> to vector<8x4xf32>
    %12 = arith.subf %8, %11 : vector<8x4xf32>
    %13 = math.exp %12 : vector<8x4xf32>
    %cst_9 = arith.constant dense<0.000000e+00> : vector<8xf32>
    %14 = vector.multi_reduction <add>, %13, %cst_9 [1] : vector<8x4xf32> to vector<8xf32>
    %15 = vector.shape_cast %14 : vector<8xf32> to vector<8x1xf32>
    %16 = tpu.reciprocal %15 {approx = true} : vector<8x1xf32> -> vector<8x1xf32>
    %17 = arith.mulf %15, %16 : vector<8x1xf32>
    %cst_10 = arith.constant 2.000000e+00 : f32
    %18 = vector.broadcast %cst_10 : f32 to vector<8x1xf32>
    %19 = arith.subf %18, %17 : vector<8x1xf32>
    %20 = arith.mulf %16, %19 : vector<8x1xf32>
    %21 = vector.broadcast %20 : vector<8x1xf32> to vector<8x4xf32>
    %22 = arith.mulf %13, %21 : vector<8x4xf32>
    %23 = vector.extract_strided_slice %22 {offsets = [0, 0], sizes = [8, 1], strides = [1, 1]} : vector<8x4xf32> to vector<8x1xf32>
    %24 = vector.extract_strided_slice %0 {offsets = [0, 0], sizes = [8, 32], strides = [1, 1]} : vector<8x128xf32> to vector<8x32xf32>
    %25 = vector.broadcast %23 : vector<8x1xf32> to vector<8x32xf32>
    %26 = arith.mulf %25, %24 : vector<8x32xf32>
    %27 = vector.extract_strided_slice %22 {offsets = [0, 1], sizes = [8, 1], strides = [1, 1]} : vector<8x4xf32> to vector<8x1xf32>
    %28 = vector.extract_strided_slice %0 {offsets = [0, 32], sizes = [8, 32], strides = [1, 1]} : vector<8x128xf32> to vector<8x32xf32>
    %29 = vector.broadcast %27 : vector<8x1xf32> to vector<8x32xf32>
    %30 = arith.mulf %29, %28 : vector<8x32xf32>
    %31 = arith.addf %26, %30 : vector<8x32xf32>
    %32 = vector.extract_strided_slice %22 {offsets = [0, 2], sizes = [8, 1], strides = [1, 1]} : vector<8x4xf32> to vector<8x1xf32>
    %33 = vector.extract_strided_slice %0 {offsets = [0, 64], sizes = [8, 32], strides = [1, 1]} : vector<8x128xf32> to vector<8x32xf32>
    %34 = vector.broadcast %32 : vector<8x1xf32> to vector<8x32xf32>
    %35 = arith.mulf %34, %33 : vector<8x32xf32>
    %36 = arith.addf %31, %35 : vector<8x32xf32>
    %37 = vector.extract_strided_slice %22 {offsets = [0, 3], sizes = [8, 1], strides = [1, 1]} : vector<8x4xf32> to vector<8x1xf32>
    %38 = vector.extract_strided_slice %0 {offsets = [0, 96], sizes = [8, 32], strides = [1, 1]} : vector<8x128xf32> to vector<8x32xf32>
    %39 = vector.broadcast %37 : vector<8x1xf32> to vector<8x32xf32>
    %40 = arith.mulf %39, %38 : vector<8x32xf32>
    %41 = arith.addf %36, %40 : vector<8x32xf32>
    %c0_11 = arith.constant 0 : index
    %c0_12 = arith.constant 0 : index
    %42 = vector.load %arg5[%c0_11, %c0_12] : memref<8x32xf32, #tpu.memory_space<vmem>>, vector<8x32xf32>
    tpu.vector_store %arg5[%c0_11, %c0_12], %41 {strides = array<i32>} : memref<8x32xf32, #tpu.memory_space<vmem>>, vector<8x32xf32>,
    return
  }
  func.func @transform_0(%arg0: i32) -> (i32, i32) {
    %c0_i32 = arith.constant 0 : i32
    %c0_i32_0 = arith.constant 0 : i32
    return %arg0, %c0_i32 : i32, i32
  }
  func.func @transform_1(%arg0: i32) -> (i32, i32) {
    %c0_i32 = arith.constant 0 : i32
    %c0_i32_0 = arith.constant 0 : i32
    %c0_i32_1 = arith.constant 0 : i32
    return %c0_i32, %c0_i32_0 : i32, i32
  }
  func.func @transform_2(%arg0: i32) -> (i32, i32) {
    %c0_i32 = arith.constant 0 : i32
    %c0_i32_0 = arith.constant 0 : i32
    %c0_i32_1 = arith.constant 0 : i32
    return %c0_i32, %c0_i32_0 : i32, i32
  }
  func.func @transform_3(%arg0: i32) -> (i32, i32) {
    %c0_i32 = arith.constant 0 : i32
    %c0_i32_0 = arith.constant 0 : i32
    %c0_i32_1 = arith.constant 0 : i32
    return %c0_i32, %c0_i32_0 : i32, i32
  }
  func.func @transform_4(%arg0: i32) -> (i32, i32) {
    %c0_i32 = arith.constant 0 : i32
    %c0_i32_0 = arith.constant 0 : i32
    return %arg0, %c0_i32 : i32, i32
  }
}

</mosaic_0001>

<llo_original>
// kernel: tile.8
$region0: #{tile.8}
  #allocation0 [shape = 's32[1]{0}', space=sflag, size = 0x4, scoped, tag = 'scoped memory for tile.8']
  %s0 = inlined_call_operand.vmem [shape: f32[128], index: 0, kind: input, shape index: {}]
  %s1 = inlined_call_operand.vmem [shape: f32[4,128], index: 1, kind: output, shape index: {}]
  // Predicated region
  $region2: #{tile.8} parent=0 // pred_check
    _
  $region3: #{tile.8} parent=0 // pred_check_branch
    %3 = sbr.rel (0) target = $region5
  $region4: #{tile.8} parent=0 // pred_region
    _
  $region5: #{tile.8} parent=0 // pred_fallthru
    _
  %v4 = vld [vmem:[%s0] ss:$0 sm:$0xff]
  %5 = vst [vmem:[%s1] sm:$0xf] %v4

// kernel: semantic_attention.1
$region0: #{semantic_attention.1}
  #allocation0 [shape = 'u32[]', space=smem, size = 0x4, offset = 0x4, fixed_abs, tag = 'smem constant byte address 0x4 - core index']
  #allocation1 [shape = 'u32[144,128]{1,0:T(1,128)}', space=vmem, size = 0x12000, scoped, tag = 'internal scratch']
  %s0 = inlined_call_operand.vmem [shape: f32[16,128], index: 0, kind: input, shape index: {}]
  %s1 = inlined_call_operand.vmem [shape: f32[128,512], index: 1, kind: input, shape index: {}]
  %s2 = inlined_call_operand.vmem [shape: f32[1,512], index: 2, kind: input, shape index: {}]
  %s3 = inlined_call_operand.vmem [shape: f32[512,4], index: 3, kind: input, shape index: {}]
  %s4 = inlined_call_operand.hbm [shape: f32[16,32], index: 4, kind: output, shape index: {}]
  %s5 = sld [smem:[#allocation0]]
  $region49: #{semantic_attention.1} parent=0
    _
  %s7 = ssub.s32 1, %s5
  %s8 = scalar_select 0, %s7, %s5
  $region1: #{semantic_attention.1} parent=0
    #allocation2 [shape = 'u8[8192]{0}', space=vmem, size = 0x2000, scoped, tag = 'output window, operand 0']
    #allocation3 [shape = 's32[2]{0}', space=sflag, size = 0x8, scoped, tag = 'scoped memory for semantic_attention.1']
    %9 = vsyncpa [#allocation3], 0
    %s10 = scalar_lea.sflag [#allocation3], 1
    %11 = vsyncpa %s10, 0
    loop: start=0, step=1, limit=4
    $region2: #{semantic_attention.1} parent=1 // loop_pre_header
      _
    $region3: #{semantic_attention.1} parent=1 // loop_header
      %s13 = sphi 0, %s17
      %p14 = scmp.ge.s32.totalorder %s13, 4
      %s23 = sphi 0, %s25
      %s26 = sphi 0, %s23
      %s27 = sphi 0, %s26
      %s43 = sphi 0, %s27
      %s47 = sphi 0, %s47
      %s49 = sphi 0, %s47
      %s50 = sphi 0, %s49
      %s64 = sphi 0, %s50
      %s68 = sphi 0, %s68
      %s70 = sphi 0, %s68
      %s71 = sphi 0, %s70
      %s85 = sphi 0, %s71
      %s89 = sphi 0, %s89
      %s91 = sphi 0, %s89
      %s92 = sphi 0, %s91
      %s106 = sphi 0, %s92
      %s112 = sphi 0, %s114
      %s115 = sphi 0, %s112
      %s116 = sphi 0, %s115
      %s132 = sphi 0, %s116
    $region4: #{semantic_attention.1} parent=1 // loop_header_branch
      %16 = sbr.rel (%p14) target = $region8
    $region5: #{semantic_attention.1} parent=1 // loop_body
      %s18 = ssub.s32 %s13, 1
      %s19 = ssub.s32 %s13, 2
      %s20 = sadd.s32 %s13, 1
      %s21 = ssub.s32 %s13, %s20
      %p22 = scmp.eq.s32.totalorder %s21, 0
      %s24 = sadd.s32 %s23, 1
      %s25 = scalar_select %p22, %s23, %s24
      %p28 = pneg %p22
      %p29 = scmp.eq.s32.totalorder %s13, 1
      %p30 = por %p28, %p29
      %p31 = scmp.ne.s32.totalorder %s23, %s26
      %p32 = scmp.eq.s32.totalorder %s13, 0
      %p33 = por %p31, %p32
      %p34 = scmp.ne.s32.totalorder %s23, %s26
      %p35 = scmp.eq.s32.totalorder %s18, 1
      %p36 = por %p34, %p35
      %p37 = scmp.ne.s32.totalorder %s26, %s27
      %p38 = scmp.eq.s32.totalorder %s18, 0
      %p39 = por %p37, %p38
      %p40 = scmp.ne.s32.totalorder %s26, %s27
      %p41 = scmp.eq.s32.totalorder %s19, 1
      %p42 = por %p40, %p41
      %p44 = scmp.ne.s32.totalorder %s27, %s43
      %p45 = scmp.eq.s32.totalorder %s19, 0
      %p46 = por %p44, %p45
      %s48 = sadd.s32 %s47, 1
      %p51 = scmp.eq.s32.totalorder %s13, 1
      %p52 = scmp.ne.s32.totalorder %s47, %s49
      %p53 = scmp.eq.s32.totalorder %s13, 0
      %p54 = por %p52, %p53
      %p55 = scmp.ne.s32.totalorder %s47, %s49
      %p56 = scmp.eq.s32.totalorder %s18, 1
      %p57 = por %p55, %p56
      %p58 = scmp.ne.s32.totalorder %s49, %s50
      %p59 = scmp.eq.s32.totalorder %s18, 0
      %p60 = por %p58, %p59
      %p61 = scmp.ne.s32.totalorder %s49, %s50
      %p62 = scmp.eq.s32.totalorder %s19, 1
      %p63 = por %p61, %p62
      %p65 = scmp.ne.s32.totalorder %s50, %s64
      %p66 = scmp.eq.s32.totalorder %s19, 0
      %p67 = por %p65, %p66
      %s69 = sadd.s32 %s68, 1
      %p72 = scmp.eq.s32.totalorder %s13, 1
      %p73 = scmp.ne.s32.totalorder %s68, %s70
      %p74 = scmp.eq.s32.totalorder %s13, 0
      %p75 = por %p73, %p74
      %p76 = scmp.ne.s32.totalorder %s68, %s70
      %p77 = scmp.eq.s32.totalorder %s18, 1
      %p78 = por %p76, %p77
      %p79 = scmp.ne.s32.totalorder %s70, %s71
      %p80 = scmp.eq.s32.totalorder %s18, 0
      %p81 = por %p79, %p80
      %p82 = scmp.ne.s32.totalorder %s70, %s71
      %p83 = scmp.eq.s32.totalorder %s19, 1
      %p84 = por %p82, %p83
      %p86 = scmp.ne.s32.totalorder %s71, %s85
      %p87 = scmp.eq.s32.totalorder %s19, 0
      %p88 = por %p86, %p87
      %s90 = sadd.s32 %s89, 1
      %p93 = scmp.eq.s32.totalorder %s13, 1
      %p94 = scmp.ne.s32.totalorder %s89, %s91
      %p95 = scmp.eq.s32.totalorder %s13, 0
      %p96 = por %p94, %p95
      %p97 = scmp.ne.s32.totalorder %s89, %s91
      %p98 = scmp.eq.s32.totalorder %s18, 1
      %p99 = por %p97, %p98
      %p100 = scmp.ne.s32.totalorder %s91, %s92
      %p101 = scmp.eq.s32.totalorder %s18, 0
      %p102 = por %p100, %p101
      %p103 = scmp.ne.s32.totalorder %s91, %s92
      %p104 = scmp.eq.s32.totalorder %s19, 1
      %p105 = por %p103, %p104
      %p107 = scmp.ne.s32.totalorder %s92, %s106
      %p108 = scmp.eq.s32.totalorder %s19, 0
      %p109 = por %p107, %p108
      %s110 = ssub.s32 %s13, %s20
      %p111 = scmp.eq.s32.totalorder %s110, 0
      %s113 = sadd.s32 %s112, 1
      %s114 = scalar_select %p111, %s112, %s113
      %p117 = pneg %p111
      %p118 = scmp.eq.s32.totalorder %s13, 1
      %p119 = por %p117, %p118
      %p120 = scmp.ne.s32.totalorder %s112, %s115
      %p121 = scmp.eq.s32.totalorder %s13, 0
      %p122 = por %p120, %p121
      %p123 = scmp.ne.s32.totalorder %s112, %s115
      %p124 = scmp.eq.s32.totalorder %s18, 1
      %p125 = por %p123, %p124
      %p126 = scmp.ne.s32.totalorder %s115, %s116
      %p127 = scmp.eq.s32.totalorder %s18, 0
      %p128 = por %p126, %p127
      %p129 = scmp.ne.s32.totalorder %s115, %s116
      %p130 = scmp.eq.s32.totalorder %s19, 1
      %p131 = por %p129, %p130
      %p133 = scmp.ne.s32.totalorder %s116, %s132
      %p134 = scmp.eq.s32.totalorder %s19, 0
      %p135 = por %p133, %p134
      %p136 = scmp.le.s32.totalorder 1, %s13
      %p137 = scmp.lt.s32.totalorder %s13, 3
      %p138 = pnand %p136, %p137
      %p139 = pneg %p138
      // Predicated region
      $region9: #{semantic_attention.1} parent=5 // pred_check
        _
      $region10: #{semantic_attention.1} parent=5 // pred_check_branch
        %141 = sbr.rel (%p138) target = $region12
      $region11: #{semantic_attention.1} parent=5 // pred_region
        %s142 = ssub.s32 %s13, 1
        // Predicated region
        $region13: #{semantic_attention.1} parent=11 // pred_check
          %p143 = pneg %p60
        $region14: #{semantic_attention.1} parent=11 // pred_check_branch
          %145 = sbr.rel (%p143) target = $region16
        $region15: #{semantic_attention.1} parent=11 // pred_region
          _
        $region16: #{semantic_attention.1} parent=11 // pred_fallthru
          _
        // Predicated region
        $region17: #{semantic_attention.1} parent=11 // pred_check
          %p146 = pneg %p81
        $region18: #{semantic_attention.1} parent=11 // pred_check_branch
          %148 = sbr.rel (%p146) target = $region20
        $region19: #{semantic_attention.1} parent=11 // pred_region
          _
        $region20: #{semantic_attention.1} parent=11 // pred_fallthru
          _
        // Predicated region
        $region21: #{semantic_attention.1} parent=11 // pred_check
          %p149 = pneg %p102
        $region22: #{semantic_attention.1} parent=11 // pred_check_branch
          %151 = sbr.rel (%p149) target = $region24
        $region23: #{semantic_attention.1} parent=11 // pred_region
          _
        $region24: #{semantic_attention.1} parent=11 // pred_fallthru
          _
      $region12: #{semantic_attention.1} parent=5 // pred_fallthru
        _
      %p152 = scmp.lt.s32.totalorder %s13, 2
      // Predicated region
      $region25: #{semantic_attention.1} parent=5 // pred_check
        %p153 = pneg %p152
      $region26: #{semantic_attention.1} parent=5 // pred_check_branch
        %155 = sbr.rel (%p153) target = $region28
      $region27: #{semantic_attention.1} parent=5 // pred_region
        // Predicated region
        $region29: #{semantic_attention.1} parent=27 // pred_check
          %p156 = pneg %p33
        $region30: #{semantic_attention.1} parent=27 // pred_check_branch
          %158 = sbr.rel (%p156) target = $region32
        $region31: #{semantic_attention.1} parent=27 // pred_region
          %p159 = scmp.lt.s32.totalorder %s13, 1
          %s160 = scalar_select %p159, %s13, 1
          %s161 = smul.addr %s160, 8
          %s162 = scalar_lea.vmem %s0, %s161
        $region32: #{semantic_attention.1} parent=27 // pred_fallthru
          _
      $region28: #{semantic_attention.1} parent=5 // pred_fallthru
        _
      %p163 = scmp.le.s32.totalorder 1, %s13
      %p164 = scmp.lt.s32.totalorder %s13, 3
      %p165 = pnand %p163, %p164
      %p166 = pneg %p165
      // Predicated region
      $region33: #{semantic_attention.1} parent=5 // pred_check
        _
      $region34: #{semantic_attention.1} parent=5 // pred_check_branch
        %168 = sbr.rel (%p165) target = $region36
      $region35: #{semantic_attention.1} parent=5 // pred_region
        %s169 = ssub.s32 %s13, 1
        %p170 = scmp.lt.s32.totalorder %s18, 1
        %s171 = scalar_select %p170, %s18, 1
        %s172 = smul.addr %s171, 8
        %s173 = scalar_lea.vmem %s0, %s172
        %p174 = pneg %p39
        %p175 = pneg %p36
        %p176 = pneg %p60
        %p177 = pneg %p57
        %p178 = pneg %p81
        %p179 = pneg %p78
        %p180 = pneg %p102
        %p181 = pneg %p99
        %p182 = pneg %p128
        %p183 = pneg %p125
        %s184 = sand.u32 %s115, 1
        %s185 = scalar_lea.sflag [#allocation3], %s184
        %s186 = sand.u32 %s115, 1
        %s187 = smul.addr %s186, 8
        %s188 = scalar_lea.vmem [#allocation2], %s187
        %p189 = scmp.lt.s32.totalorder %s18, 1
        %s190 = scalar_select %p189, %s18, 1
        %s191 = smul.addr %s190, 8
        %s192 = scalar_lea.vmem %s0, %s191
        %v193 = vld [vmem:[%s192] sm:$0xff]
        %v194 = vld [vmem:[%s1] sm:$0xff]
        %v195 = vld [vmem:[%s1 + $0x8] sm:$0xff]
        %v196 = vld [vmem:[%s1 + $0x10] sm:$0xff]
        %v197 = vld [vmem:[%s1 + $0x18] sm:$0xff]
        %v198 = vld [vmem:[%s1 + $0x20] sm:$0xff]
        %v199 = vld [vmem:[%s1 + $0x28] sm:$0xff]
        %v200 = vld [vmem:[%s1 + $0x30] sm:$0xff]
        %v201 = vld [vmem:[%s1 + $0x38] sm:$0xff]
        %v202 = vld [vmem:[%s1 + $0x40] sm:$0xff]
        %v203 = vld [vmem:[%s1 + $0x48] sm:$0xff]
        %v204 = vld [vmem:[%s1 + $0x50] sm:$0xff]
        %v205 = vld [vmem:[%s1 + $0x58] sm:$0xff]
        %v206 = vld [vmem:[%s1 + $0x60] sm:$0xff]
        %v207 = vld [vmem:[%s1 + $0x68] sm:$0xff]
        %v208 = vld [vmem:[%s1 + $0x70] sm:$0xff]
        %v209 = vld [vmem:[%s1 + $0x78] sm:$0xff]
        %v210 = vld [vmem:[%s1 + $0x80] sm:$0xff]
        %v211 = vld [vmem:[%s1 + $0x88] sm:$0xff]
        %v212 = vld [vmem:[%s1 + $0x90] sm:$0xff]
        %v213 = vld [vmem:[%s1 + $0x98] sm:$0xff]
        %v214 = vld [vmem:[%s1 + $0xa0] sm:$0xff]
        %v215 = vld [vmem:[%s1 + $0xa8] sm:$0xff]
        %v216 = vld [vmem:[%s1 + $0xb0] sm:$0xff]
        %v217 = vld [vmem:[%s1 + $0xb8] sm:$0xff]
        %v218 = vld [vmem:[%s1 + $0xc0] sm:$0xff]
        %v219 = vld [vmem:[%s1 + $0xc8] sm:$0xff]
        %v220 = vld [vmem:[%s1 + $0xd0] sm:$0xff]
        %v221 = vld [vmem:[%s1 + $0xd8] sm:$0xff]
        %v222 = vld [vmem:[%s1 + $0xe0] sm:$0xff]
        %v223 = vld [vmem:[%s1 + $0xe8] sm:$0xff]
        %v224 = vld [vmem:[%s1 + $0xf0] sm:$0xff]
        %v225 = vld [vmem:[%s1 + $0xf8] sm:$0xff]
        %v226 = vld [vmem:[%s1 + $0x100] sm:$0xff]
        %v227 = vld [vmem:[%s1 + $0x108] sm:$0xff]
        %v228 = vld [vmem:[%s1 + $0x110] sm:$0xff]
        %v229 = vld [vmem:[%s1 + $0x118] sm:$0xff]
        %v230 = vld [vmem:[%s1 + $0x120] sm:$0xff]
        %v231 = vld [vmem:[%s1 + $0x128] sm:$0xff]
        %v232 = vld [vmem:[%s1 + $0x130] sm:$0xff]
        %v233 = vld [vmem:[%s1 + $0x138] sm:$0xff]
        %v234 = vld [vmem:[%s1 + $0x140] sm:$0xff]
        %v235 = vld [vmem:[%s1 + $0x148] sm:$0xff]
        %v236 = vld [vmem:[%s1 + $0x150] sm:$0xff]
        %v237 = vld [vmem:[%s1 + $0x158] sm:$0xff]
        %v238 = vld [vmem:[%s1 + $0x160] sm:$0xff]
        %v239 = vld [vmem:[%s1 + $0x168] sm:$0xff]
        %v240 = vld [vmem:[%s1 + $0x170] sm:$0xff]
        %v241 = vld [vmem:[%s1 + $0x178] sm:$0xff]
        %v242 = vld [vmem:[%s1 + $0x180] sm:$0xff]
        %v243 = vld [vmem:[%s1 + $0x188] sm:$0xff]
        %v244 = vld [vmem:[%s1 + $0x190] sm:$0xff]
        %v245 = vld [vmem:[%s1 + $0x198] sm:$0xff]
        %v246 = vld [vmem:[%s1 + $0x1a0] sm:$0xff]
        %v247 = vld [vmem:[%s1 + $0x1a8] sm:$0xff]
        %v248 = vld [vmem:[%s1 + $0x1b0] sm:$0xff]
        %v249 = vld [vmem:[%s1 + $0x1b8] sm:$0xff]
        %v250 = vld [vmem:[%s1 + $0x1c0] sm:$0xff]
        %v251 = vld [vmem:[%s1 + $0x1c8] sm:$0xff]
        %v252 = vld [vmem:[%s1 + $0x1d0] sm:$0xff]
        %v253 = vld [vmem:[%s1 + $0x1d8] sm:$0xff]
        %v254 = vld [vmem:[%s1 + $0x1e0] sm:$0xff]
        %v255 = vld [vmem:[%s1 + $0x1e8] sm:$0xff]
        %v256 = vld [vmem:[%s1 + $0x1f0] sm:$0xff]
        %v257 = vld [vmem:[%s1 + $0x1f8] sm:$0xff]
        %v258 = vld [vmem:[%s2] sm:$0xf]
        %v260 = vlaneseq
        %v261 = vshrl.u32 %v260, 7
        %v262 = vsub.s32 0, %v261
        %v263 = vrot.slane %v258, %v262
        %v264 = vlaneseq
        %v265 = vshrl.u32 %v264, 7
        %v266 = vsub.s32 1, %v265
        %v267 = vrot.slane %v258, %v266
        %v268 = vlaneseq
        %v269 = vshrl.u32 %v268, 7
        %v270 = vsub.s32 2, %v269
        %v271 = vrot.slane %v258, %v270
        %v272 = vlaneseq
        %v273 = vshrl.u32 %v272, 7
        %v274 = vsub.s32 3, %v273
        %v275 = vrot.slane %v258, %v274
        %280 = vmatprep.subr.mxu0 %v195
        %281 = vmatpush1.msra.mxu0 %v194
        %282 = vmatprep.subr.mxu0 %v199
        %283 = vmatpush1.msra.mxu0 %v198
        %284 = vmatprep.subr.mxu0 %v203
        %285 = vmatpush1.msra.mxu0 %v202
        %286 = vmatprep.subr.mxu0 %v207
        %287 = vmatpush1.msra.mxu0 %v206
        %288 = vmatprep.subr.mxu0 %v211
        %289 = vmatpush1.msra.mxu0 %v210
        %290 = vmatprep.subr.mxu0 %v215
        %291 = vmatpush1.msra.mxu0 %v214
        %292 = vmatprep.subr.mxu0 %v219
        %293 = vmatpush1.msra.mxu0 %v218
        %294 = vmatprep.subr.mxu0 %v223
        %295 = vmatpush1.msra.mxu0 %v222
        %296 = vmatprep.subr.mxu0 %v227
        %297 = vmatpush1.msra.mxu0 %v226
        %298 = vmatprep.subr.mxu0 %v231
        %299 = vmatpush1.msra.mxu0 %v230
        %300 = vmatprep.subr.mxu0 %v235
        %301 = vmatpush1.msra.mxu0 %v234
        %302 = vmatprep.subr.mxu0 %v239
        %303 = vmatpush1.msra.mxu0 %v238
        %304 = vmatprep.subr.mxu0 %v243
        %305 = vmatpush1.msra.mxu0 %v242
        %306 = vmatprep.subr.mxu0 %v247
        %307 = vmatpush1.msra.mxu0 %v246
        %308 = vmatprep.subr.mxu0 %v251
        %309 = vmatpush1.msra.mxu0 %v250
        %310 = vmatprep.subr.mxu0 %v255
        %311 = vmatpush1.msra.mxu0 %v254
        %312 = vmatprep.subr.mxu0 0.0
        %313 = vmatpush1.msra.mxu0 0.0
        %314 = vmatprep.subr.mxu0 0.0
        %315 = vmatpush1.msra.mxu0 0.0
        %316 = vmatprep.subr.mxu0 0.0
        %317 = vmatpush1.msra.mxu0 0.0
        %318 = vmatprep.subr.mxu0 0.0
        %319 = vmatpush1.msra.mxu0 0.0
        %320 = vmatprep.subr.mxu0 0.0
        %321 = vmatpush1.msra.mxu0 0.0
        %322 = vmatprep.subr.mxu0 0.0
        %323 = vmatpush1.msra.mxu0 0.0
        %324 = vmatprep.subr.mxu0 0.0
        %325 = vmatpush1.msra.mxu0 0.0
        %326 = vmatprep.subr.mxu0 0.0
        %327 = vmatpush1.msra.mxu0 0.0
        %328 = vmatprep.subr.mxu0 0.0
        %329 = vmatpush1.msra.mxu0 0.0
        %330 = vmatprep.subr.mxu0 0.0
        %331 = vmatpush1.msra.mxu0 0.0
        %332 = vmatprep.subr.mxu0 0.0
        %333 = vmatpush1.msra.mxu0 0.0
        %334 = vmatprep.subr.mxu0 0.0
        %335 = vmatpush1.msra.mxu0 0.0
        %336 = vmatprep.subr.mxu0 0.0
        %337 = vmatpush1.msra.mxu0 0.0
        %338 = vmatprep.subr.mxu0 0.0
        %339 = vmatpush1.msra.mxu0 0.0
        %340 = vmatprep.subr.mxu0 0.0
        %341 = vmatpush1.msra.mxu0 0.0
        %342 = vmatprep.subr.mxu0 0.0
        %343 = vmatpush1.msra.mxu0 0.0
        %344 = vmatprep.mubr.f32.mxu0 0.0
        %345 = vmatmul.mubr.f32.gmra.mrb[0].mxu0 %v193
        %v346 = vpop.f32.mrb[0].mxu0
        %v347 = vadd.f32 %v263, %v346
        %v348 = vpop.f32.mrb[0].mxu0
        %v349 = vadd.f32 %v267, %v348
        %350 = vdwg.mxu0
        %351 = vmatprep.subr.mxu0 %v197
        %352 = vmatpush1.msra.mxu0 %v196
        %353 = vmatprep.subr.mxu0 %v201
        %354 = vmatpush1.msra.mxu0 %v200
        %355 = vmatprep.subr.mxu0 %v205
        %356 = vmatpush1.msra.mxu0 %v204
        %357 = vmatprep.subr.mxu0 %v209
        %358 = vmatpush1.msra.mxu0 %v208
        %359 = vmatprep.subr.mxu0 %v213
        %360 = vmatpush1.msra.mxu0 %v212
        %361 = vmatprep.subr.mxu0 %v217
        %362 = vmatpush1.msra.mxu0 %v216
        %363 = vmatprep.subr.mxu0 %v221
        %364 = vmatpush1.msra.mxu0 %v220
        %365 = vmatprep.subr.mxu0 %v225
        %366 = vmatpush1.msra.mxu0 %v224
        %367 = vmatprep.subr.mxu0 %v229
        %368 = vmatpush1.msra.mxu0 %v228
        %369 = vmatprep.subr.mxu0 %v233
        %370 = vmatpush1.msra.mxu0 %v232
        %371 = vmatprep.subr.mxu0 %v237
        %372 = vmatpush1.msra.mxu0 %v236
        %373 = vmatprep.subr.mxu0 %v241
        %374 = vmatpush1.msra.mxu0 %v240
        %375 = vmatprep.subr.mxu0 %v245
        %376 = vmatpush1.msra.mxu0 %v244
        %377 = vmatprep.subr.mxu0 %v249
        %378 = vmatpush1.msra.mxu0 %v248
        %379 = vmatprep.subr.mxu0 %v253
        %380 = vmatpush1.msra.mxu0 %v252
        %381 = vmatprep.subr.mxu0 %v257
        %382 = vmatpush1.msra.mxu0 %v256
        %383 = vmatprep.subr.mxu0 0.0
        %384 = vmatpush1.msra.mxu0 0.0
        %385 = vmatprep.subr.mxu0 0.0
        %386 = vmatpush1.msra.mxu0 0.0
        %387 = vmatprep.subr.mxu0 0.0
        %388 = vmatpush1.msra.mxu0 0.0
        %389 = vmatprep.subr.mxu0 0.0
        %390 = vmatpush1.msra.mxu0 0.0
        %391 = vmatprep.subr.mxu0 0.0
        %392 = vmatpush1.msra.mxu0 0.0
        %393 = vmatprep.subr.mxu0 0.0
        %394 = vmatpush1.msra.mxu0 0.0
        %395 = vmatprep.subr.mxu0 0.0
        %396 = vmatpush1.msra.mxu0 0.0
        %397 = vmatprep.subr.mxu0 0.0
        %398 = vmatpush1.msra.mxu0 0.0
        %399 = vmatprep.subr.mxu0 0.0
        %400 = vmatpush1.msra.mxu0 0.0
        %401 = vmatprep.subr.mxu0 0.0
        %402 = vmatpush1.msra.mxu0 0.0
        %403 = vmatprep.subr.mxu0 0.0
        %404 = vmatpush1.msra.mxu0 0.0
        %405 = vmatprep.subr.mxu0 0.0
        %406 = vmatpush1.msra.mxu0 0.0
        %407 = vmatprep.subr.mxu0 0.0
        %408 = vmatpush1.msra.mxu0 0.0
        %409 = vmatprep.subr.mxu0 0.0
        %410 = vmatpush1.msra.mxu0 0.0
        %411 = vmatprep.subr.mxu0 0.0
        %412 = vmatpush1.msra.mxu0 0.0
        %413 = vmatprep.subr.mxu0 0.0
        %414 = vmatpush1.msra.mxu0 0.0
        %415 = vmatprep.mubr.f32.mxu0 0.0
        %416 = vmatmul.mubr.f32.gmra.mrb[0].mxu0 %v193
        %v417 = vpop.f32.mrb[0].mxu0
        %v418 = vadd.f32 %v271, %v417
        %v419 = vpop.f32.mrb[0].mxu0
        %v420 = vadd.f32 %v275, %v419
        %421 = vdwg.mxu0
        %v422 = vtanh.pop %v347
        %v423 = vtanh.pop %v349
        %v424 = vtanh.pop %v418
        %v425 = vtanh.pop %v420
        %v426 = vld [vmem:[%s3] sm:$0xff]
        %v427 = vld [vmem:[%s3 + $0x8] sm:$0xff]
        %v428 = vld [vmem:[%s3 + $0x10] sm:$0xff]
        %v429 = vld [vmem:[%s3 + $0x18] sm:$0xff]
        %v430 = vld [vmem:[%s3 + $0x20] sm:$0xff]
        %v431 = vld [vmem:[%s3 + $0x28] sm:$0xff]
        %v432 = vld [vmem:[%s3 + $0x30] sm:$0xff]
        %v433 = vld [vmem:[%s3 + $0x38] sm:$0xff]
        %v434 = vld [vmem:[%s3 + $0x40] sm:$0xff]
        %v435 = vld [vmem:[%s3 + $0x48] sm:$0xff]
        %v436 = vld [vmem:[%s3 + $0x50] sm:$0xff]
        %v437 = vld [vmem:[%s3 + $0x58] sm:$0xff]
        %v438 = vld [vmem:[%s3 + $0x60] sm:$0xff]
        %v439 = vld [vmem:[%s3 + $0x68] sm:$0xff]
        %v440 = vld [vmem:[%s3 + $0x70] sm:$0xff]
        %v441 = vld [vmem:[%s3 + $0x78] sm:$0xff]
        %v442 = vld [vmem:[%s3 + $0x80] sm:$0xff]
        %v443 = vld [vmem:[%s3 + $0x88] sm:$0xff]
        %v444 = vld [vmem:[%s3 + $0x90] sm:$0xff]
        %v445 = vld [vmem:[%s3 + $0x98] sm:$0xff]
        %v446 = vld [vmem:[%s3 + $0xa0] sm:$0xff]
        %v447 = vld [vmem:[%s3 + $0xa8] sm:$0xff]
        %v448 = vld [vmem:[%s3 + $0xb0] sm:$0xff]
        %v449 = vld [vmem:[%s3 + $0xb8] sm:$0xff]
        %v450 = vld [vmem:[%s3 + $0xc0] sm:$0xff]
        %v451 = vld [vmem:[%s3 + $0xc8] sm:$0xff]
        %v452 = vld [vmem:[%s3 + $0xd0] sm:$0xff]
        %v453 = vld [vmem:[%s3 + $0xd8] sm:$0xff]
        %v454 = vld [vmem:[%s3 + $0xe0] sm:$0xff]
        %v455 = vld [vmem:[%s3 + $0xe8] sm:$0xff]
        %v456 = vld [vmem:[%s3 + $0xf0] sm:$0xff]
        %v457 = vld [vmem:[%s3 + $0xf8] sm:$0xff]
        %v458 = vld [vmem:[%s3 + $0x100] sm:$0xff]
        %v459 = vld [vmem:[%s3 + $0x108] sm:$0xff]
        %v460 = vld [vmem:[%s3 + $0x110] sm:$0xff]
        %v461 = vld [vmem:[%s3 + $0x118] sm:$0xff]
        %v462 = vld [vmem:[%s3 + $0x120] sm:$0xff]
        %v463 = vld [vmem:[%s3 + $0x128] sm:$0xff]
        %v464 = vld [vmem:[%s3 + $0x130] sm:$0xff]
        %v465 = vld [vmem:[%s3 + $0x138] sm:$0xff]
        %v466 = vld [vmem:[%s3 + $0x140] sm:$0xff]
        %v467 = vld [vmem:[%s3 + $0x148] sm:$0xff]
        %v468 = vld [vmem:[%s3 + $0x150] sm:$0xff]
        %v469 = vld [vmem:[%s3 + $0x158] sm:$0xff]
        %v470 = vld [vmem:[%s3 + $0x160] sm:$0xff]
        %v471 = vld [vmem:[%s3 + $0x168] sm:$0xff]
        %v472 = vld [vmem:[%s3 + $0x170] sm:$0xff]
        %v473 = vld [vmem:[%s3 + $0x178] sm:$0xff]
        %v474 = vld [vmem:[%s3 + $0x180] sm:$0xff]
        %v475 = vld [vmem:[%s3 + $0x188] sm:$0xff]
        %v476 = vld [vmem:[%s3 + $0x190] sm:$0xff]
        %v477 = vld [vmem:[%s3 + $0x198] sm:$0xff]
        %v478 = vld [vmem:[%s3 + $0x1a0] sm:$0xff]
        %v479 = vld [vmem:[%s3 + $0x1a8] sm:$0xff]
        %v480 = vld [vmem:[%s3 + $0x1b0] sm:$0xff]
        %v481 = vld [vmem:[%s3 + $0x1b8] sm:$0xff]
        %v482 = vld [vmem:[%s3 + $0x1c0] sm:$0xff]
        %v483 = vld [vmem:[%s3 + $0x1c8] sm:$0xff]
        %v484 = vld [vmem:[%s3 + $0x1d0] sm:$0xff]
        %v485 = vld [vmem:[%s3 + $0x1d8] sm:$0xff]
        %v486 = vld [vmem:[%s3 + $0x1e0] sm:$0xff]
        %v487 = vld [vmem:[%s3 + $0x1e8] sm:$0xff]
        %v488 = vld [vmem:[%s3 + $0x1f0] sm:$0xff]
        %v489 = vld [vmem:[%s3 + $0x1f8] sm:$0xff]
        %490 = vmatprep.subr.mxu0 0.0
        %491 = vmatpush1.msra.mxu0 %v426
        %492 = vmatprep.subr.mxu0 0.0
        %493 = vmatpush1.msra.mxu0 %v427
        %494 = vmatprep.subr.mxu0 0.0
        %495 = vmatpush1.msra.mxu0 %v428
        %496 = vmatprep.subr.mxu0 0.0
        %497 = vmatpush1.msra.mxu0 %v429
        %498 = vmatprep.subr.mxu0 0.0
        %499 = vmatpush1.msra.mxu0 %v430
        %500 = vmatprep.subr.mxu0 0.0
        %501 = vmatpush1.msra.mxu0 %v431
        %502 = vmatprep.subr.mxu0 0.0
        %503 = vmatpush1.msra.mxu0 %v432
        %504 = vmatprep.subr.mxu0 0.0
        %505 = vmatpush1.msra.mxu0 %v433
        %506 = vmatprep.subr.mxu0 0.0
        %507 = vmatpush1.msra.mxu0 %v434
        %508 = vmatprep.subr.mxu0 0.0
        %509 = vmatpush1.msra.mxu0 %v435
        %510 = vmatprep.subr.mxu0 0.0
        %511 = vmatpush1.msra.mxu0 %v436
        %512 = vmatprep.subr.mxu0 0.0
        %513 = vmatpush1.msra.mxu0 %v437
        %514 = vmatprep.subr.mxu0 0.0
        %515 = vmatpush1.msra.mxu0 %v438
        %516 = vmatprep.subr.mxu0 0.0
        %517 = vmatpush1.msra.mxu0 %v439
        %518 = vmatprep.subr.mxu0 0.0
        %519 = vmatpush1.msra.mxu0 %v440
        %520 = vmatprep.subr.mxu0 0.0
        %521 = vmatpush1.msra.mxu0 %v441
        %522 = vmatprep.subr.mxu0 0.0
        %523 = vmatpush1.msra.mxu0 %v442
        %524 = vmatprep.subr.mxu0 0.0
        %525 = vmatpush1.msra.mxu0 %v443
        %526 = vmatprep.subr.mxu0 0.0
        %527 = vmatpush1.msra.mxu0 %v444
        %528 = vmatprep.subr.mxu0 0.0
        %529 = vmatpush1.msra.mxu0 %v445
        %530 = vmatprep.subr.mxu0 0.0
        %531 = vmatpush1.msra.mxu0 %v446
        %532 = vmatprep.subr.mxu0 0.0
        %533 = vmatpush1.msra.mxu0 %v447
        %534 = vmatprep.subr.mxu0 0.0
        %535 = vmatpush1.msra.mxu0 %v448
        %536 = vmatprep.subr.mxu0 0.0
        %537 = vmatpush1.msra.mxu0 %v449
        %538 = vmatprep.subr.mxu0 0.0
        %539 = vmatpush1.msra.mxu0 %v450
        %540 = vmatprep.subr.mxu0 0.0
        %541 = vmatpush1.msra.mxu0 %v451
        %542 = vmatprep.subr.mxu0 0.0
        %543 = vmatpush1.msra.mxu0 %v452
        %544 = vmatprep.subr.mxu0 0.0
        %545 = vmatpush1.msra.mxu0 %v453
        %546 = vmatprep.subr.mxu0 0.0
        %547 = vmatpush1.msra.mxu0 %v454
        %548 = vmatprep.subr.mxu0 0.0
        %549 = vmatpush1.msra.mxu0 %v455
        %550 = vmatprep.subr.mxu0 0.0
        %551 = vmatpush1.msra.mxu0 %v456
        %552 = vmatprep.subr.mxu0 0.0
        %553 = vmatpush1.msra.mxu0 %v457
        %554 = vmatprep.mubr.f32.mxu0 %v423
        %555 = vmatmul.mubr.f32.gmra.mrb[0].mxu0 %v422
        %v556 = vpop.f32.mrb[0].mxu0
        %v557 = vadd.f32 0.0, %v556
        %v558 = vpop.f32.mrb[0].mxu0
        %559 = vdwg.mxu0
        %560 = vmatprep.subr.mxu0 0.0
        %561 = vmatpush1.msra.mxu0 %v458
        %562 = vmatprep.subr.mxu0 0.0
        %563 = vmatpush1.msra.mxu0 %v459
        %564 = vmatprep.subr.mxu0 0.0
        %565 = vmatpush1.msra.mxu0 %v460
        %566 = vmatprep.subr.mxu0 0.0
        %567 = vmatpush1.msra.mxu0 %v461
        %568 = vmatprep.subr.mxu0 0.0
        %569 = vmatpush1.msra.mxu0 %v462
        %570 = vmatprep.subr.mxu0 0.0
        %571 = vmatpush1.msra.mxu0 %v463
        %572 = vmatprep.subr.mxu0 0.0
        %573 = vmatpush1.msra.mxu0 %v464
        %574 = vmatprep.subr.mxu0 0.0
        %575 = vmatpush1.msra.mxu0 %v465
        %576 = vmatprep.subr.mxu0 0.0
        %577 = vmatpush1.msra.mxu0 %v466
        %578 = vmatprep.subr.mxu0 0.0
        %579 = vmatpush1.msra.mxu0 %v467
        %580 = vmatprep.subr.mxu0 0.0
        %581 = vmatpush1.msra.mxu0 %v468
        %582 = vmatprep.subr.mxu0 0.0
        %583 = vmatpush1.msra.mxu0 %v469
        %584 = vmatprep.subr.mxu0 0.0
        %585 = vmatpush1.msra.mxu0 %v470
        %586 = vmatprep.subr.mxu0 0.0
        %587 = vmatpush1.msra.mxu0 %v471
        %588 = vmatprep.subr.mxu0 0.0
        %589 = vmatpush1.msra.mxu0 %v472
        %590 = vmatprep.subr.mxu0 0.0
        %591 = vmatpush1.msra.mxu0 %v473
        %592 = vmatprep.subr.mxu0 0.0
        %593 = vmatpush1.msra.mxu0 %v474
        %594 = vmatprep.subr.mxu0 0.0
        %595 = vmatpush1.msra.mxu0 %v475
        %596 = vmatprep.subr.mxu0 0.0
        %597 = vmatpush1.msra.mxu0 %v476
        %598 = vmatprep.subr.mxu0 0.0
        %599 = vmatpush1.msra.mxu0 %v477
        %600 = vmatprep.subr.mxu0 0.0
        %601 = vmatpush1.msra.mxu0 %v478
        %602 = vmatprep.subr.mxu0 0.0
        %603 = vmatpush1.msra.mxu0 %v479
        %604 = vmatprep.subr.mxu0 0.0
        %605 = vmatpush1.msra.mxu0 %v480
        %606 = vmatprep.subr.mxu0 0.0
        %607 = vmatpush1.msra.mxu0 %v481
        %608 = vmatprep.subr.mxu0 0.0
        %609 = vmatpush1.msra.mxu0 %v482
        %610 = vmatprep.subr.mxu0 0.0
        %611 = vmatpush1.msra.mxu0 %v483
        %612 = vmatprep.subr.mxu0 0.0
        %613 = vmatpush1.msra.mxu0 %v484
        %614 = vmatprep.subr.mxu0 0.0
        %615 = vmatpush1.msra.mxu0 %v485
        %616 = vmatprep.subr.mxu0 0.0
        %617 = vmatpush1.msra.mxu0 %v486
        %618 = vmatprep.subr.mxu0 0.0
        %619 = vmatpush1.msra.mxu0 %v487
        %620 = vmatprep.subr.mxu0 0.0
        %621 = vmatpush1.msra.mxu0 %v488
        %622 = vmatprep.subr.mxu0 0.0
        %623 = vmatpush1.msra.mxu0 %v489
        %624 = vmatprep.mubr.f32.mxu0 %v425
        %625 = vmatmul.mubr.f32.gmra.mrb[0].mxu0 %v424
        %v626 = vpop.f32.mrb[0].mxu0
        %v627 = vadd.f32 %v557, %v626
        %v628 = vpop.f32.mrb[0].mxu0
        %629 = vdwg.mxu0
        %vm630 = vcmask 31744
        %v631 = vsel %vm630, %v627, -inf
        %632 = vmax.xlane.f32.xlu0 %v631
        %v633 = vpop.xlane.xlu0 %632
        %v634 = vsub.f32 %v627, %v633
        %v635 = vmul.f32 %v634, 1.442695
        %v636 = vpow.pop %v635
        %v637 = vsel %vm630, %v636, 0.0
        %638 = vadd.xlane.f32.xlu0 %v637
        %v639 = vpop.xlane.xlu0 %638
        %v640 = vrcp.pop %v639
        %v641 = vmul.f32 %v639, %v640
        %v642 = vsub.f32 2.0, %v641
        %v643 = vmul.f32 %v640, %v642
        %v644 = vmul.f32 %v636, %v643
        %646 = vset.pattern.permute.xlu0 0
        %647 = vperm.xlu0 %646, %v644
        %v648 = vpop.permute.xlu0 %647
        %v650 = vmul.f32 %v648, %v193
        %651 = vset.pattern.permute.xlu0 1
        %652 = vperm.xlu0 %651, %v644
        %v653 = vpop.permute.xlu0 %652
        %v655 = vmul.f32 %v653, %v193
        %657 = vrot.lane.b32.xlu0 %v655, 96
        %v658 = vpop.permute.xlu0 %657
        %v660 = vadd.f32 %v650, %v658
        %661 = vset.pattern.permute.xlu0 2
        %662 = vperm.xlu0 %661, %v644
        %v663 = vpop.permute.xlu0 %662
        %v665 = vmul.f32 %v663, %v193
        %667 = vrot.lane.b32.xlu0 %v665, 64
        %v668 = vpop.permute.xlu0 %667
        %v670 = vadd.f32 %v660, %v668
        %671 = vset.pattern.permute.xlu0 3
        %672 = vperm.xlu0 %671, %v644
        %v673 = vpop.permute.xlu0 %672
        %v675 = vmul.f32 %v673, %v193
        %677 = vrot.lane.b32.xlu0 %v675, 32
        %v678 = vpop.permute.xlu0 %677
        %v680 = vadd.f32 %v670, %v678
        %vm681 = vcmask 261120
        %682 = vst.msk [vmem:[%s188] sm:$0xff] %vm681, %v680
        %s683 = sand.u32 %s115, 1
        %s684 = scalar_lea.sflag [#allocation3], %s683
        %s685 = sand.u32 %s115, 1
        %s686 = smul.addr %s685, 8
        %s687 = scalar_lea.vmem [#allocation2], %s686
        // Predicated region
        $region37: #{semantic_attention.1} parent=35 // pred_check
          %p688 = pneg %p125
        $region38: #{semantic_attention.1} parent=35 // pred_check_branch
          %690 = sbr.rel (%p688) target = $region40
        $region39: #{semantic_attention.1} parent=35 // pred_region
          %s692 = ssub.s32 128, 128
          %693 = vsyncadd %s684, %s692
          %s694 = smul.addr %s18, 128
          %s695 = scalar_lea.hbm %s4, %s694
          %s697 = sshll.u32 %s687, 4
          %s698 = int_to_ptr.vmem [resolvable:$true] %s697
          %700 = dma.vmem_to_hbm [thread:$0]  %s698, 128, %s695, %s684
        $region40: #{semantic_attention.1} parent=35 // pred_fallthru
          _
      $region36: #{semantic_attention.1} parent=5 // pred_fallthru
        _
      %p701 = scmp.le.s32.totalorder 2, %s13
      // Predicated region
      $region41: #{semantic_attention.1} parent=5 // pred_check
        %p702 = pneg %p701
      $region42: #{semantic_attention.1} parent=5 // pred_check_branch
        %704 = sbr.rel (%p702) target = $region44
      $region43: #{semantic_attention.1} parent=5 // pred_region
        %s705 = ssub.s32 %s13, 2
        // Predicated region
        $region45: #{semantic_attention.1} parent=43 // pred_check
          %p706 = pneg %p131
        $region46: #{semantic_attention.1} parent=43 // pred_check_branch
          %708 = sbr.rel (%p706) target = $region48
        $region47: #{semantic_attention.1} parent=43 // pred_region
          %s709 = sand.u32 %s116, 1
          %s710 = scalar_lea.sflag [#allocation3], %s709
          %s711 = sand.u32 %s116, 1
          %s712 = smul.addr %s711, 8
          %s713 = scalar_lea.vmem [#allocation2], %s712
          %714 = dma.done %s710, 128
        $region48: #{semantic_attention.1} parent=43 // pred_fallthru
          _
      $region44: #{semantic_attention.1} parent=5 // pred_fallthru
        _
    $region6: #{semantic_attention.1} parent=1 // loop_footer
      %s17 = sadd.s32 1, %s13
    $region7: #{semantic_attention.1} parent=1 // loop_footer_branch
      %12 = sbr.rel target = $region3
    $region8: #{semantic_attention.1} parent=1 // loop_exit
      _
    %715 = vsyncpa [#allocation3], 1
    %s716 = scalar_lea.sflag [#allocation3], 1
    %717 = vsyncpa %s716, 1

</llo_original>
